<compile_context>
chip_gen: v5e
topology: v5e:2x2
jax: 0.10.0
libtpu: 0.0.40
codegen_flags: <defaults>
</compile_context>

<pallas_src>
import jax
import jax.numpy as jnp
from jax.experimental import pallas as pl
from jax.experimental.pallas import tpu as pltpu


_MIN_TILE_N = 512            # >=512 lanes per step keeps v5e/v6e near HBM roofline
_VMEM_BLOCK_BUDGET = 8 << 20  # budget for double-buffered in+out blocks


def _choose_tile_n(n, per_lane_channels, itemsize,
                   vmem_block_budget_bytes=_VMEM_BLOCK_BUDGET):
    """Lanes per grid step: as large as fits the VMEM block budget.

    per_lane_channels = total rows moved per lane per step across all
    (single-buffered) input + output blocks; Pallas double-buffers each.
    Result is either the full N or a multiple of 128 (>= 512).
    """
    if n <= _MIN_TILE_N:
        return n
    per_lane_bytes = 2 * per_lane_channels * itemsize   # x2: double buffering
    tn = vmem_block_budget_bytes // max(per_lane_bytes, 1)
    tn = max(_MIN_TILE_N, (tn // 128) * 128)
    return n if tn >= n else int(tn)


def _group_all_kernel(xyz_t_ref, feat_ref, out_ref):
    # xyz_t_ref : (1, 3,   TN)   pre-transposed coordinates
    # feat_ref  : (1, C,   TN)
    # out_ref   : (1, C+3, TN)   dense, lane-major output slab
    out_ref[0, 0:3, :] = xyz_t_ref[0].astype(out_ref.dtype)
    out_ref[0, 3:, :] = feat_ref[0].astype(out_ref.dtype)


def _copy_kernel(src_ref, out_ref):
    # features=None path: out is just the transposed xyz.
    out_ref[...] = src_ref[...].astype(out_ref.dtype)


def group_all(xyz, new_xyz=None, features=None, use_xyz=True,
              *, small_fallback_bytes=1 << 20,
              vmem_block_budget_bytes=_VMEM_BLOCK_BUDGET):
    """Pallas implementation of GroupAll.forward. `new_xyz` is ignored.

    xyz: (B, N, 3); features: (B, C, N) or None.
    Returns (B, C+3, 1, N), (B, 3, 1, N) or (B, C, 1, N) matching PyTorch.
    """
    del new_xyz
    B, N, three = xyz.shape
    assert three == 3

    if features is not None:
        Bf, C, Nf = features.shape
        assert Bf == B and Nf == N
        out_dtype = features.dtype
    else:
        C = 0
        out_dtype = xyz.dtype

    # use_xyz=False with features present: output == features.unsqueeze(2);
    # metadata-only, no data movement needed.
    if features is not None and not use_xyz:
        return features[:, :, None, :]

    out_channels = (C + 3) if features is not None else 3
    itemsize = jnp.dtype(out_dtype).itemsize
    out_bytes = B * out_channels * N * itemsize

    # Tiny shapes: pallas_call launch + DMA setup dominates; let XLA's fused
    # transpose/concat handle it.
    if out_bytes < small_fallback_bytes:
        return group_all_ref(xyz, features, use_xyz=use_xyz)

    # Pre-transpose xyz (B, N, 3) -> (B, 3, N); only 12N bytes per batch, and
    # it makes every in-kernel load/store lane-dense with no XLU work.
    # TODO(synk): the transpose itself stays in XLA; a lane-sparse (N, 3)
    # in-kernel transpose was rejected by the earlier perf review.
    xyz_t = jnp.transpose(xyz, (0, 2, 1)).astype(out_dtype)

    cparams = pltpu.CompilerParams(
        dimension_semantics=("parallel", "parallel"))
    cost = pl.CostEstimate(flops=0, transcendentals=0,
                           bytes_accessed=2 * out_bytes)

    if features is None:
        TN = _choose_tile_n(N, per_lane_channels=3 + 3, itemsize=itemsize,
                            vmem_block_budget_bytes=vmem_block_budget_bytes)
        nt = pl.cdiv(N, TN)
        out = pl.pallas_call(
            _copy_kernel,
            out_shape=jax.ShapeDtypeStruct((B, 3, N), out_dtype),
            grid=(B, nt),
            in_specs=[pl.BlockSpec((1, 3, TN), lambda b, t: (b, 0, t))],
            out_specs=pl.BlockSpec((1, 3, TN), lambda b, t: (b, 0, t)),
            compiler_params=cparams,
            cost_estimate=cost,
        )(xyz_t)
        return out[:, :, None, :]  # (B, 3, 1, N), metadata-only reshape

    # xyz block (3) + features block (C) + output block (C+3) rows per lane.
    TN = _choose_tile_n(N, per_lane_channels=2 * C + 6, itemsize=itemsize,
                        vmem_block_budget_bytes=vmem_block_budget_bytes)
    nt = pl.cdiv(N, TN)
    out = pl.pallas_call(
        _group_all_kernel,
        out_shape=jax.ShapeDtypeStruct((B, C + 3, N), out_dtype),
        grid=(B, nt),
        in_specs=[
            pl.BlockSpec((1, 3, TN), lambda b, t: (b, 0, t)),
            pl.BlockSpec((1, C, TN), lambda b, t: (b, 0, t)),
        ],
        out_specs=pl.BlockSpec((1, C + 3, TN), lambda b, t: (b, 0, t)),
        compiler_params=cparams,
        cost_estimate=cost,
    )(xyz_t, features)
    return out[:, :, None, :]  # (B, C+3, 1, N), metadata-only reshape


def group_all_ref(xyz, features=None, use_xyz=True):
    """Pure-JAX reference matching the PyTorch forward."""
    grouped_xyz = jnp.transpose(xyz, (0, 2, 1))[:, :, None, :]   # (B, 3, 1, N)
    if features is not None:
        grouped_features = features[:, :, None, :]               # (B, C, 1, N)
        if use_xyz:
            return jnp.concatenate(
                [grouped_xyz.astype(features.dtype), grouped_features], axis=1)
        return grouped_features
    return grouped_xyz


if __name__ == "__main__":
    key = jax.random.PRNGKey(0)
    k1, k2, k3, k4 = jax.random.split(key, 4)

    # Small shapes; force the Pallas path so the kernel itself is exercised.
    B, N, C = 2, 16, 4
    xyz = jax.random.normal(k1, (B, N, 3), dtype=jnp.float32)
    features = jax.random.normal(k2, (B, C, N), dtype=jnp.float32)
    new_xyz = jnp.zeros((B, 1, 3), dtype=jnp.float32)  # ignored, as in PyTorch

    out = jax.block_until_ready(
        group_all(xyz, new_xyz, features, use_xyz=True, small_fallback_bytes=0))
    ref = group_all_ref(xyz, features, use_xyz=True)
    assert out.shape == (B, C + 3, 1, N), out.shape
    assert jnp.allclose(out, ref, atol=1e-6), "mismatch vs reference"

    # features=None path (Pallas copy kernel).
    out_xyz_only = jax.block_until_ready(
        group_all(xyz, new_xyz, None, small_fallback_bytes=0))
    assert jnp.allclose(out_xyz_only, group_all_ref(xyz, None), atol=1e-6)

    # use_xyz=False path (pure metadata reshape).
    out_feat_only = jax.block_until_ready(
        group_all(xyz, new_xyz, features, use_xyz=False))
    assert jnp.allclose(out_feat_only,
                        group_all_ref(xyz, features, use_xyz=False), atol=1e-6)

    # Larger shape: adaptive TN collapses the N axis to a single block
    # (grid = (2, 1)), exercising the big-tile path.
    B2, N2, C2 = 2, 1024, 32
    xyz2 = jax.random.normal(k3, (B2, N2, 3), dtype=jnp.float32)
    feat2 = jax.random.normal(k4, (B2, C2, N2), dtype=jnp.float32)
    out2 = jax.block_until_ready(
        group_all(xyz2, None, feat2, use_xyz=True, small_fallback_bytes=0))
    assert out2.shape == (B2, C2 + 3, 1, N2), out2.shape
    assert jnp.allclose(out2, group_all_ref(xyz2, feat2, use_xyz=True),
                        atol=1e-6)

    # Same shape with a tight VMEM block budget to force TN=512 tiling
    # (grid = (2, 2)), exercising the multi-tile / masked-store machinery.
    out3 = jax.block_until_ready(
        group_all(xyz2, None, feat2, use_xyz=True, small_fallback_bytes=0,
                  vmem_block_budget_bytes=300_000))
    assert jnp.allclose(out3, group_all_ref(xyz2, feat2, use_xyz=True),
                        atol=1e-6)

    print("KERNEL_OK")
</pallas_src>

<mosaic_0001>
module attributes {stable_mosaic.version = 11 : i64} {
  func.func @_group_all_kernel(%arg0: i32, %arg1: i32, %arg2: memref<1x3x16xf32, #tpu.memory_space<vmem>>, %arg3: memref<1x4x16xf32, #tpu.memory_space<vmem>>, %arg4: memref<1x7x16xf32, #tpu.memory_space<vmem>>) attributes {dimension_semantics = [#tpu.dimension_semantics<parallel>, #tpu.dimension_semantics<parallel>], iteration_bounds = array<i64: 2, 1>, scalar_prefetch = 0 : i64, scratch_operands = 0 : i64, tpu.core_type = #tpu.core_type<tc>, window_params = [{transform_indices = @transform_0, window_bounds = array<i64: 1, 3, 16>}, {transform_indices = @transform_1, window_bounds = array<i64: 1, 4, 16>}, {transform_indices = @transform_2, window_bounds = array<i64: 1, 7, 16>}]} {
    %c0 = arith.constant 0 : index
    %c0_0 = arith.constant 0 : index
    %c0_1 = arith.constant 0 : index
    %0 = vector.load %arg2[%c0, %c0_0, %c0_1] : memref<1x3x16xf32, #tpu.memory_space<vmem>>, vector<1x3x16xf32>
    %1 = vector.shape_cast %0 : vector<1x3x16xf32> to vector<3x16xf32>
    %c0_2 = arith.constant 0 : index
    %c0_3 = arith.constant 0 : index
    %c0_4 = arith.constant 0 : index
    %2 = vector.load %arg4[%c0_2, %c0_3, %c0_4] : memref<1x7x16xf32, #tpu.memory_space<vmem>>, vector<1x3x16xf32>
    %3 = vector.shape_cast %2 : vector<1x3x16xf32> to vector<3x16xf32>
    %4 = vector.shape_cast %1 : vector<3x16xf32> to vector<1x3x16xf32>
    tpu.vector_store %arg4[%c0_2, %c0_3, %c0_4], %4 {strides = array<i32>} : memref<1x7x16xf32, #tpu.memory_space<vmem>>, vector<1x3x16xf32>,
    %c0_5 = arith.constant 0 : index
    %c0_6 = arith.constant 0 : index
    %c0_7 = arith.constant 0 : index
    %5 = vector.load %arg3[%c0_5, %c0_6, %c0_7] : memref<1x4x16xf32, #tpu.memory_space<vmem>>, vector<1x4x16xf32>
    %6 = vector.shape_cast %5 : vector<1x4x16xf32> to vector<4x16xf32>
    %c0_8 = arith.constant 0 : index
    %c3 = arith.constant 3 : index
    %c0_9 = arith.constant 0 : index
    %7 = vector.load %arg4[%c0_8, %c3, %c0_9] : memref<1x7x16xf32, #tpu.memory_space<vmem>>, vector<1x4x16xf32>
    %8 = vector.shape_cast %7 : vector<1x4x16xf32> to vector<4x16xf32>
    %9 = vector.shape_cast %6 : vector<4x16xf32> to vector<1x4x16xf32>
    tpu.vector_store %arg4[%c0_8, %c3, %c0_9], %9 {strides = array<i32>} : memref<1x7x16xf32, #tpu.memory_space<vmem>>, vector<1x4x16xf32>,
    return
  }
  func.func @transform_0(%arg0: i32, %arg1: i32) -> (i32, i32, i32) {
    %c0_i32 = arith.constant 0 : i32
    %c0_i32_0 = arith.constant 0 : i32
    return %arg0, %c0_i32, %arg1 : i32, i32, i32
  }
  func.func @transform_1(%arg0: i32, %arg1: i32) -> (i32, i32, i32) {
    %c0_i32 = arith.constant 0 : i32
    %c0_i32_0 = arith.constant 0 : i32
    return %arg0, %c0_i32, %arg1 : i32, i32, i32
  }
  func.func @transform_2(%arg0: i32, %arg1: i32) -> (i32, i32, i32) {
    %c0_i32 = arith.constant 0 : i32
    %c0_i32_0 = arith.constant 0 : i32
    return %arg0, %c0_i32, %arg1 : i32, i32, i32
  }
}

</mosaic_0001>

<llo_original>
// kernel: tpu_custom_call.1
$region0: #{tpu_custom_call.1}
  #allocation0 [shape = 'u32[]', space=smem, size = 0x4, offset = 0x4, fixed_abs, tag = 'smem constant byte address 0x4 - core index']
  #allocation1 [shape = 'u32[72,128]{1,0:T(1,128)}', space=vmem, size = 0x9000, scoped, tag = 'internal scratch']
  %s0 = inlined_call_operand.vmem [shape: f32[2,3,16], index: 0, kind: input, shape index: {}]
  %s1 = inlined_call_operand.vmem [shape: f32[2,4,16], index: 1, kind: input, shape index: {}]
  %s2 = inlined_call_operand.vmem [shape: f32[2,7,16], index: 2, kind: output, shape index: {}]
  %s3 = sld [smem:[#allocation0]]
  $region41: #{tpu_custom_call.1} parent=0
    _
  %s5 = ssub.s32 1, %s3
  %s6 = scalar_select 0, %s5, %s3
  loop: start=0, step=1, limit=4
  $region2: #{tpu_custom_call.1} parent=0 // loop_pre_header
    _
  $region3: #{tpu_custom_call.1} parent=0 // loop_header
    %s8 = sphi 0, %s12
    %p9 = scmp.ge.s32.totalorder %s8, 4
    %s15 = sphi 0, %s27
    %s16 = sphi 0, %s23
    %s17 = sphi 0, %s15
    %s18 = sphi 0, %s16
    %s19 = sphi 0, %s17
    %s20 = sphi 0, %s18
    %s32 = sphi 0, %s34
    %s35 = sphi 0, %s32
    %s36 = sphi 0, %s35
    %s52 = sphi 0, %s36
    %s60 = sphi 0, %s62
    %s63 = sphi 0, %s60
    %s64 = sphi 0, %s63
    %s80 = sphi 0, %s64
    %s88 = sphi 0, %s90
    %s91 = sphi 0, %s88
    %s92 = sphi 0, %s91
    %s108 = sphi 0, %s92
  $region4: #{tpu_custom_call.1} parent=0 // loop_header_branch
    %11 = sbr.rel (%p9) target = $region8
  $region5: #{tpu_custom_call.1} parent=0 // loop_body
    %s13 = ssub.s32 %s8, 1
    %s14 = ssub.s32 %s8, 2
    %s21 = sadd.s32 1, %s16
    %p22 = scmp.ge.s32.totalorder %s21, 1
    %s23 = scalar_select %p22, 0, %s21
    %s24 = sadd.s32 1, %s15
    %s25 = scalar_select %p22, %s24, %s15
    %p26 = scmp.ge.s32.totalorder %s25, 2
    %s27 = scalar_select %p26, 0, %s25
    %s28 = ssub.s32 %s15, %s27
    %s29 = ssub.s32 %s16, %s23
    %s30 = sor.u32 %s28, %s29
    %p31 = scmp.eq.s32.totalorder %s30, 0
    %s33 = sadd.s32 %s32, 1
    %s34 = scalar_select %p31, %s32, %s33
    %p37 = pneg %p31
    %p38 = scmp.eq.s32.totalorder %s8, 1
    %p39 = por %p37, %p38
    %p40 = scmp.ne.s32.totalorder %s32, %s35
    %p41 = scmp.eq.s32.totalorder %s8, 0
    %p42 = por %p40, %p41
    %p43 = scmp.ne.s32.totalorder %s32, %s35
    %p44 = scmp.eq.s32.totalorder %s13, 1
    %p45 = por %p43, %p44
    %p46 = scmp.ne.s32.totalorder %s35, %s36
    %p47 = scmp.eq.s32.totalorder %s13, 0
    %p48 = por %p46, %p47
    %p49 = scmp.ne.s32.totalorder %s35, %s36
    %p50 = scmp.eq.s32.totalorder %s14, 1
    %p51 = por %p49, %p50
    %p53 = scmp.ne.s32.totalorder %s36, %s52
    %p54 = scmp.eq.s32.totalorder %s14, 0
    %p55 = por %p53, %p54
    %s56 = ssub.s32 %s15, %s27
    %s57 = ssub.s32 %s16, %s23
    %s58 = sor.u32 %s56, %s57
    %p59 = scmp.eq.s32.totalorder %s58, 0
    %s61 = sadd.s32 %s60, 1
    %s62 = scalar_select %p59, %s60, %s61
    %p65 = pneg %p59
    %p66 = scmp.eq.s32.totalorder %s8, 1
    %p67 = por %p65, %p66
    %p68 = scmp.ne.s32.totalorder %s60, %s63
    %p69 = scmp.eq.s32.totalorder %s8, 0
    %p70 = por %p68, %p69
    %p71 = scmp.ne.s32.totalorder %s60, %s63
    %p72 = scmp.eq.s32.totalorder %s13, 1
    %p73 = por %p71, %p72
    %p74 = scmp.ne.s32.totalorder %s63, %s64
    %p75 = scmp.eq.s32.totalorder %s13, 0
    %p76 = por %p74, %p75
    %p77 = scmp.ne.s32.totalorder %s63, %s64
    %p78 = scmp.eq.s32.totalorder %s14, 1
    %p79 = por %p77, %p78
    %p81 = scmp.ne.s32.totalorder %s64, %s80
    %p82 = scmp.eq.s32.totalorder %s14, 0
    %p83 = por %p81, %p82
    %s84 = ssub.s32 %s15, %s27
    %s85 = ssub.s32 %s16, %s23
    %s86 = sor.u32 %s84, %s85
    %p87 = scmp.eq.s32.totalorder %s86, 0
    %s89 = sadd.s32 %s88, 1
    %s90 = scalar_select %p87, %s88, %s89
    %p93 = pneg %p87
    %p94 = scmp.eq.s32.totalorder %s8, 1
    %p95 = por %p93, %p94
    %p96 = scmp.ne.s32.totalorder %s88, %s91
    %p97 = scmp.eq.s32.totalorder %s8, 0
    %p98 = por %p96, %p97
    %p99 = scmp.ne.s32.totalorder %s88, %s91
    %p100 = scmp.eq.s32.totalorder %s13, 1
    %p101 = por %p99, %p100
    %p102 = scmp.ne.s32.totalorder %s91, %s92
    %p103 = scmp.eq.s32.totalorder %s13, 0
    %p104 = por %p102, %p103
    %p105 = scmp.ne.s32.totalorder %s91, %s92
    %p106 = scmp.eq.s32.totalorder %s14, 1
    %p107 = por %p105, %p106
    %p109 = scmp.ne.s32.totalorder %s92, %s108
    %p110 = scmp.eq.s32.totalorder %s14, 0
    %p111 = por %p109, %p110
    %p112 = scmp.le.s32.totalorder 1, %s8
    %p113 = scmp.lt.s32.totalorder %s8, 3
    %p114 = pnand %p112, %p113
    %p115 = pneg %p114
    // Predicated region
    $region9: #{tpu_custom_call.1} parent=5 // pred_check
      _
    $region10: #{tpu_custom_call.1} parent=5 // pred_check_branch
      %117 = sbr.rel (%p114) target = $region12
    $region11: #{tpu_custom_call.1} parent=5 // pred_region
      %s118 = ssub.s32 %s8, 1
    $region12: #{tpu_custom_call.1} parent=5 // pred_fallthru
      _
    %p119 = scmp.lt.s32.totalorder %s8, 2
    // Predicated region
    $region13: #{tpu_custom_call.1} parent=5 // pred_check
      %p120 = pneg %p119
    $region14: #{tpu_custom_call.1} parent=5 // pred_check_branch
      %122 = sbr.rel (%p120) target = $region16
    $region15: #{tpu_custom_call.1} parent=5 // pred_region
      // Predicated region
      $region17: #{tpu_custom_call.1} parent=15 // pred_check
        %p123 = pneg %p42
      $region18: #{tpu_custom_call.1} parent=15 // pred_check_branch
        %125 = sbr.rel (%p123) target = $region20
      $region19: #{tpu_custom_call.1} parent=15 // pred_region
        %p126 = scmp.lt.s32.totalorder %s15, 1
        %s127 = scalar_select %p126, %s15, 1
        %p128 = scmp.lt.s32.totalorder %s16, 0
        %s129 = scalar_select %p128, %s16, 0
        %s130 = sadd.s32 %s129, %s127
        %s131 = smul.addr %s130, 4
        %s132 = scalar_lea.vmem %s0, %s131
      $region20: #{tpu_custom_call.1} parent=15 // pred_fallthru
        _
      // Predicated region
      $region21: #{tpu_custom_call.1} parent=15 // pred_check
        %p133 = pneg %p70
      $region22: #{tpu_custom_call.1} parent=15 // pred_check_branch
        %135 = sbr.rel (%p133) target = $region24
      $region23: #{tpu_custom_call.1} parent=15 // pred_region
        %p136 = scmp.lt.s32.totalorder %s15, 1
        %s137 = scalar_select %p136, %s15, 1
        %p138 = scmp.lt.s32.totalorder %s16, 0
        %s139 = scalar_select %p138, %s16, 0
        %s140 = sadd.s32 %s139, %s137
        %s141 = smul.addr %s140, 4
        %s142 = scalar_lea.vmem %s1, %s141
      $region24: #{tpu_custom_call.1} parent=15 // pred_fallthru
        _
    $region16: #{tpu_custom_call.1} parent=5 // pred_fallthru
      _
    %p143 = scmp.le.s32.totalorder 1, %s8
    %p144 = scmp.lt.s32.totalorder %s8, 3
    %p145 = pnand %p143, %p144
    %p146 = pneg %p145
    // Predicated region
    $region25: #{tpu_custom_call.1} parent=5 // pred_check
      _
    $region26: #{tpu_custom_call.1} parent=5 // pred_check_branch
      %148 = sbr.rel (%p145) target = $region28
    $region27: #{tpu_custom_call.1} parent=5 // pred_region
      %s149 = ssub.s32 %s8, 1
      %p150 = scmp.lt.s32.totalorder %s17, 1
      %s151 = scalar_select %p150, %s17, 1
      %p152 = scmp.lt.s32.totalorder %s18, 0
      %s153 = scalar_select %p152, %s18, 0
      %s154 = sadd.s32 %s153, %s151
      %s155 = smul.addr %s154, 4
      %s156 = scalar_lea.vmem %s0, %s155
      %p157 = pneg %p48
      %p158 = pneg %p45
      %p159 = scmp.lt.s32.totalorder %s17, 1
      %s160 = scalar_select %p159, %s17, 1
      %p161 = scmp.lt.s32.totalorder %s18, 0
      %s162 = scalar_select %p161, %s18, 0
      %s163 = sadd.s32 %s162, %s160
      %s164 = smul.addr %s163, 4
      %s165 = scalar_lea.vmem %s1, %s164
      %p166 = pneg %p76
      %p167 = pneg %p73
      %p168 = pneg %p104
      %p169 = pneg %p101
      %p170 = scmp.lt.s32.totalorder %s17, 1
      %s171 = scalar_select %p170, %s17, 1
      %p172 = scmp.lt.s32.totalorder %s18, 0
      %s173 = scalar_select %p172, %s18, 0
      %s174 = sadd.s32 %s173, %s171
      %s175 = smul.addr %s174, 8
      %s176 = scalar_lea.vmem %s2, %s175
      %p177 = scmp.lt.s32.totalorder %s17, 1
      %s178 = scalar_select %p177, %s17, 1
      %p179 = scmp.lt.s32.totalorder %s18, 0
      %s180 = scalar_select %p179, %s18, 0
      %s181 = sadd.s32 %s180, %s178
      %s182 = smul.addr %s181, 4
      %s183 = scalar_lea.vmem %s0, %s182
      %p184 = scmp.lt.s32.totalorder %s17, 1
      %s185 = scalar_select %p184, %s17, 1
      %p186 = scmp.lt.s32.totalorder %s18, 0
      %s187 = scalar_select %p186, %s18, 0
      %s188 = sadd.s32 %s187, %s185
      %s189 = smul.addr %s188, 4
      %s190 = scalar_lea.vmem %s1, %s189
      %p191 = scmp.lt.s32.totalorder %s17, 1
      %s192 = scalar_select %p191, %s17, 1
      %p193 = scmp.lt.s32.totalorder %s18, 0
      %s194 = scalar_select %p193, %s18, 0
      %s195 = sadd.s32 %s194, %s192
      %s196 = smul.addr %s195, 8
      %s197 = scalar_lea.vmem %s2, %s196
      %v198 = vld [vmem:[%s183] sm:$0x7]
      %vm199 = vcmask 124928
      %200 = vst.msk [vmem:[%s197] sm:$0x7] %vm199, %v198
      %v201 = vld [vmem:[%s190] sm:$0xf]
      %vm202 = vcmask 125952
      %203 = vst.msk [vmem:[%s197 + $0x3] sm:$0xf] %vm202, %v201
      %p204 = scmp.lt.s32.totalorder %s17, 1
      %s205 = scalar_select %p204, %s17, 1
      %p206 = scmp.lt.s32.totalorder %s18, 0
      %s207 = scalar_select %p206, %s18, 0
      %s208 = sadd.s32 %s207, %s205
      %s209 = smul.addr %s208, 8
      %s210 = scalar_lea.vmem %s2, %s209
      // Predicated region
      $region29: #{tpu_custom_call.1} parent=27 // pred_check
        %p211 = pneg %p101
      $region30: #{tpu_custom_call.1} parent=27 // pred_check_branch
        %213 = sbr.rel (%p211) target = $region32
      $region31: #{tpu_custom_call.1} parent=27 // pred_region
        _
      $region32: #{tpu_custom_call.1} parent=27 // pred_fallthru
        _
    $region28: #{tpu_custom_call.1} parent=5 // pred_fallthru
      _
    %p214 = scmp.le.s32.totalorder 2, %s8
    // Predicated region
    $region33: #{tpu_custom_call.1} parent=5 // pred_check
      %p215 = pneg %p214
    $region34: #{tpu_custom_call.1} parent=5 // pred_check_branch
      %217 = sbr.rel (%p215) target = $region36
    $region35: #{tpu_custom_call.1} parent=5 // pred_region
      %s218 = ssub.s32 %s8, 2
      // Predicated region
      $region37: #{tpu_custom_call.1} parent=35 // pred_check
        %p219 = pneg %p107
      $region38: #{tpu_custom_call.1} parent=35 // pred_check_branch
        %221 = sbr.rel (%p219) target = $region40
      $region39: #{tpu_custom_call.1} parent=35 // pred_region
        %p222 = scmp.lt.s32.totalorder %s19, 1
        %s223 = scalar_select %p222, %s19, 1
        %p224 = scmp.lt.s32.totalorder %s20, 0
        %s225 = scalar_select %p224, %s20, 0
        %s226 = sadd.s32 %s225, %s223
        %s227 = smul.addr %s226, 8
        %s228 = scalar_lea.vmem %s2, %s227
      $region40: #{tpu_custom_call.1} parent=35 // pred_fallthru
        _
    $region36: #{tpu_custom_call.1} parent=5 // pred_fallthru
      _
  $region6: #{tpu_custom_call.1} parent=0 // loop_footer
    %s12 = sadd.s32 1, %s8
  $region7: #{tpu_custom_call.1} parent=0 // loop_footer_branch
    %7 = sbr.rel target = $region3
  $region8: #{tpu_custom_call.1} parent=0 // loop_exit
    _

</llo_original>
